<compile_context>
chip_gen: v6e
topology: v6e:2x2x1
jax: 0.10.0
libtpu: 0.0.40
codegen_flags: <defaults>
</compile_context>

<pallas_src>
import functools

import jax
import jax.numpy as jnp
from jax.experimental import pallas as pl
from jax.experimental.pallas import tpu as pltpu


# ----------------------------------------------------------------------------
# Fused kernel: (two-hot gather+add via one MXU matmul) + LayerNorm
# ----------------------------------------------------------------------------
def _timestamp_kernel(idx_ref, table_ref, g_ref, b_ref, o_ref, *, eps):
    bm = idx_ref.shape[0]          # rows in this tile
    V = table_ref.shape[0]         # S + T (concatenated vocab)

    idx = idx_ref[...]             # (bm, 2) int32: [stamp_idx, S + pos_idx]
    col = jax.lax.broadcasted_iota(jnp.int32, (bm, V), 1)
    # Two-hot row selector: column `stamp` and column `S+pos` are 1 -> one MXU
    # matmul produces  time_table[stamp] + pos_table[pos]  (the ranges are
    # disjoint by construction), everything stays in VMEM.
    sel = ((col == idx[:, 0:1]) | (col == idx[:, 1:2])).astype(jnp.float32)
    x = jnp.dot(sel, table_ref[...], preferred_element_type=jnp.float32)

    # LayerNorm over the embedding dim (biased variance, eps inside rsqrt),
    # matching torch.nn.LayerNorm(E, eps=1e-6) semantics.
    mu = jnp.mean(x, axis=-1, keepdims=True)
    xc = x - mu
    var = jnp.mean(xc * xc, axis=-1, keepdims=True)
    xn = xc * jax.lax.rsqrt(var + eps)
    o_ref[...] = xn * g_ref[...] + b_ref[...]


# ----------------------------------------------------------------------------
# Wrapper
# ----------------------------------------------------------------------------
def timestamp_forward(params, stamp, *, max_block_rows=1024):
    """stamp: (B, T) int -> (B, T, E) float32 (== PyTorch timestamp.forward)."""
    B, T = stamp.shape
    S, E = params["time_stamp_emb"].shape
    M = B * T

    # Single full-array block at small M (no padding); row-tiled parallel grid
    # at large M (block rows multiple of 8; tail block is write-masked).
    block_m = M if M <= max_block_rows else max_block_rows
    grid = (pl.cdiv(M, block_m),)

    # Packed per-row indices: column 0 = time-of-day index, column 1 = S + pos.
    stamp_flat = stamp.reshape(M).astype(jnp.int32)
    pos_flat = S + jnp.tile(jnp.arange(T, dtype=jnp.int32), B)
    idx = jnp.stack([stamp_flat, pos_flat], axis=1)                     # (M, 2)

    # Concatenated embedding table, resident in VMEM across all grid steps.
    table = jnp.concatenate(
        [params["time_stamp_emb"], params["tempo_pos_emb"][:T]], axis=0)  # (S+T, E)

    out = pl.pallas_call(
        functools.partial(_timestamp_kernel, eps=1e-6),
        out_shape=jax.ShapeDtypeStruct((M, E), jnp.float32),
        grid=grid,
        in_specs=[
            pl.BlockSpec((block_m, 2), lambda i: (i, 0)),    # packed indices
            pl.BlockSpec((S + T, E), lambda i: (0, 0)),      # fused table (VMEM-resident)
            pl.BlockSpec((1, E), lambda i: (0, 0)),          # LN gamma
            pl.BlockSpec((1, E), lambda i: (0, 0)),          # LN beta
        ],
        out_specs=pl.BlockSpec((block_m, E), lambda i: (i, 0)),
        compiler_params=pltpu.CompilerParams(
            dimension_semantics=("parallel",)),
    )(idx, table,
      params["ln_gamma"].reshape(1, E), params["ln_beta"].reshape(1, E))

    return out.reshape(B, T, E)


# ----------------------------------------------------------------------------
if __name__ == "__main__":
    # Small shapes consistent with the module.
    B = 2
    history_len = 12
    emb_channels = 16
    steps_per_day = 48

    key = jax.random.PRNGKey(0)
    k_table, k_pos, k_stamp = jax.random.split(key, 3)

    params = {
        # nn.Embedding default init ~ N(0, 1)
        "time_stamp_emb": jax.random.normal(
            k_table, (steps_per_day, emb_channels), jnp.float32),
        "tempo_pos_emb": jax.random.normal(
            k_pos, (history_len, emb_channels), jnp.float32),
        # nn.LayerNorm default affine init
        "ln_gamma": jnp.ones((emb_channels,), jnp.float32),
        "ln_beta": jnp.zeros((emb_channels,), jnp.float32),
    }

    stamp = jax.random.randint(
        k_stamp, (B, history_len), 0, steps_per_day, jnp.int32)

    fwd = jax.jit(timestamp_forward)
    out = jax.block_until_ready(fwd(params, stamp))
    assert out.shape == (B, history_len, emb_channels), out.shape

    # Pure-JAX reference (mirrors the PyTorch module).
    te = params["time_stamp_emb"][stamp]                         # (B, T, E)
    x = te + params["tempo_pos_emb"][None, :history_len, :]
    mu = x.mean(-1, keepdims=True)
    var = ((x - mu) ** 2).mean(-1, keepdims=True)
    ref = (x - mu) / jnp.sqrt(var + 1e-6) * params["ln_gamma"] + params["ln_beta"]

    err = float(jnp.max(jnp.abs(out - ref)))
    assert err < 1e-5, err
    print("KERNEL_OK")
</pallas_src>

<mosaic_0001>
module attributes {stable_mosaic.version = 11 : i64} {
  func.func @_timestamp_kernel(%arg0: i32, %arg1: memref<24x2xi32, #tpu.memory_space<vmem>>, %arg2: memref<60x16xf32, #tpu.memory_space<vmem>>, %arg3: memref<1x16xf32, #tpu.memory_space<vmem>>, %arg4: memref<1x16xf32, #tpu.memory_space<vmem>>, %arg5: memref<24x16xf32, #tpu.memory_space<vmem>>) attributes {dimension_semantics = [#tpu.dimension_semantics<parallel>], iteration_bounds = array<i64: 1>, scalar_prefetch = 0 : i64, scratch_operands = 0 : i64, tpu.core_type = #tpu.core_type<tc>, window_params = [{transform_indices = @transform_0, window_bounds = array<i64: 24, 2>}, {pipeline_mode = #tpu.pipeline_mode<synchronous>, transform_indices = @transform_1, window_bounds = array<i64: 60, 16>}, {pipeline_mode = #tpu.pipeline_mode<synchronous>, transform_indices = @transform_2, window_bounds = array<i64: 1, 16>}, {pipeline_mode = #tpu.pipeline_mode<synchronous>, transform_indices = @transform_3, window_bounds = array<i64: 1, 16>}, {transform_indices = @transform_4, window_bounds = array<i64: 24, 16>}]} {
    %c0 = arith.constant 0 : index
    %c0_0 = arith.constant 0 : index
    %0 = vector.load %arg1[%c0, %c0_0] : memref<24x2xi32, #tpu.memory_space<vmem>>, vector<24x2xi32>
    %1 = tpu.iota {dimensions = array<i32: 1>} : vector<24x60xi32>
    %2 = vector.extract_strided_slice %0 {offsets = [0, 0], sizes = [24, 1], strides = [1, 1]} : vector<24x2xi32> to vector<24x1xi32>
    %3 = vector.broadcast %2 : vector<24x1xi32> to vector<24x60xi32>
    %4 = arith.cmpi eq, %1, %3 : vector<24x60xi32>
    %5 = vector.extract_strided_slice %0 {offsets = [0, 1], sizes = [24, 1], strides = [1, 1]} : vector<24x2xi32> to vector<24x1xi32>
    %6 = vector.broadcast %5 : vector<24x1xi32> to vector<24x60xi32>
    %7 = arith.cmpi eq, %1, %6 : vector<24x60xi32>
    %8 = arith.ori %4, %7 : vector<24x60xi1>
    %9 = arith.extui %8 : vector<24x60xi1> to vector<24x60xi32>
    %10 = arith.sitofp %9 : vector<24x60xi32> to vector<24x60xf32>
    %c0_1 = arith.constant 0 : index
    %c0_2 = arith.constant 0 : index
    %11 = vector.load %arg2[%c0_1, %c0_2] : memref<60x16xf32, #tpu.memory_space<vmem>>, vector<60x16xf32>
    %cst = arith.constant dense<0.000000e+00> : vector<24x16xf32>
    %12 = tpu.matmul %10, %11, %cst {dimension_numbers = #tpu.dot_dimension_numbers<[1], [0], [0], [1], [0, 0, 1, 1], [], []>} : vector<24x60xf32>, vector<60x16xf32>, vector<24x16xf32> -> vector<24x16xf32>
    %cst_3 = arith.constant dense<0.000000e+00> : vector<24xf32>
    %13 = vector.multi_reduction <add>, %12, %cst_3 [1] : vector<24x16xf32> to vector<24xf32>
    %14 = vector.shape_cast %13 : vector<24xf32> to vector<24x1xf32>
    %cst_4 = arith.constant 1.600000e+01 : f32
    %15 = vector.broadcast %cst_4 : f32 to vector<24x1xf32>
    %16 = arith.divf %14, %15 : vector<24x1xf32>
    %17 = vector.broadcast %16 : vector<24x1xf32> to vector<24x16xf32>
    %18 = arith.subf %12, %17 : vector<24x16xf32>
    %19 = arith.mulf %18, %18 : vector<24x16xf32>
    %cst_5 = arith.constant dense<0.000000e+00> : vector<24xf32>
    %20 = vector.multi_reduction <add>, %19, %cst_5 [1] : vector<24x16xf32> to vector<24xf32>
    %21 = vector.shape_cast %20 : vector<24xf32> to vector<24x1xf32>
    %cst_6 = arith.constant 1.600000e+01 : f32
    %22 = vector.broadcast %cst_6 : f32 to vector<24x1xf32>
    %23 = arith.divf %21, %22 : vector<24x1xf32>
    %cst_7 = arith.constant 9.99999997E-7 : f32
    %24 = vector.broadcast %cst_7 : f32 to vector<24x1xf32>
    %25 = arith.addf %23, %24 : vector<24x1xf32>
    %26 = math.rsqrt %25 : vector<24x1xf32>
    %27 = vector.broadcast %26 : vector<24x1xf32> to vector<24x16xf32>
    %28 = arith.mulf %18, %27 : vector<24x16xf32>
    %c0_8 = arith.constant 0 : index
    %c0_9 = arith.constant 0 : index
    %29 = vector.load %arg3[%c0_8, %c0_9] : memref<1x16xf32, #tpu.memory_space<vmem>>, vector<1x16xf32>
    %30 = vector.broadcast %29 : vector<1x16xf32> to vector<24x16xf32>
    %31 = arith.mulf %28, %30 : vector<24x16xf32>
    %c0_10 = arith.constant 0 : index
    %c0_11 = arith.constant 0 : index
    %32 = vector.load %arg4[%c0_10, %c0_11] : memref<1x16xf32, #tpu.memory_space<vmem>>, vector<1x16xf32>
    %33 = vector.broadcast %32 : vector<1x16xf32> to vector<24x16xf32>
    %34 = arith.addf %31, %33 : vector<24x16xf32>
    %c0_12 = arith.constant 0 : index
    %c0_13 = arith.constant 0 : index
    %35 = vector.load %arg5[%c0_12, %c0_13] : memref<24x16xf32, #tpu.memory_space<vmem>>, vector<24x16xf32>
    tpu.vector_store %arg5[%c0_12, %c0_13], %34 {strides = array<i32>} : memref<24x16xf32, #tpu.memory_space<vmem>>, vector<24x16xf32>,
    return
  }
  func.func @transform_0(%arg0: i32) -> (i32, i32) {
    %c0_i32 = arith.constant 0 : i32
    %c0_i32_0 = arith.constant 0 : i32
    return %arg0, %c0_i32 : i32, i32
  }
  func.func @transform_1(%arg0: i32) -> (i32, i32) {
    %c0_i32 = arith.constant 0 : i32
    %c0_i32_0 = arith.constant 0 : i32
    %c0_i32_1 = arith.constant 0 : i32
    return %c0_i32, %c0_i32_0 : i32, i32
  }
  func.func @transform_2(%arg0: i32) -> (i32, i32) {
    %c0_i32 = arith.constant 0 : i32
    %c0_i32_0 = arith.constant 0 : i32
    %c0_i32_1 = arith.constant 0 : i32
    return %c0_i32, %c0_i32_0 : i32, i32
  }
  func.func @transform_3(%arg0: i32) -> (i32, i32) {
    %c0_i32 = arith.constant 0 : i32
    %c0_i32_0 = arith.constant 0 : i32
    %c0_i32_1 = arith.constant 0 : i32
    return %c0_i32, %c0_i32_0 : i32, i32
  }
  func.func @transform_4(%arg0: i32) -> (i32, i32) {
    %c0_i32 = arith.constant 0 : i32
    %c0_i32_0 = arith.constant 0 : i32
    return %arg0, %c0_i32 : i32, i32
  }
}

</mosaic_0001>

<llo_original>
// kernel: timestamp_forward.1
$region0: #{timestamp_forward.1}
  #allocation0 [shape = 'u32[]', space=smem, size = 0x4, offset = 0x4, fixed_abs, tag = 'smem constant byte address 0x4 - core index']
  #allocation1 [shape = 'u32[144,128]{1,0:T(1,128)}', space=vmem, size = 0x12000, scoped, tag = 'internal scratch']
  %s0 = inlined_call_operand.vmem [shape: s32[24,2], index: 0, kind: input, shape index: {}]
  %s1 = inlined_call_operand.vmem [shape: f32[60,16], index: 1, kind: input, shape index: {}]
  %s2 = inlined_call_operand.vmem [shape: f32[1,16], index: 2, kind: input, shape index: {}]
  %s3 = inlined_call_operand.vmem [shape: f32[1,16], index: 3, kind: input, shape index: {}]
  %s4 = inlined_call_operand.vmem [shape: f32[24,16], index: 4, kind: output, shape index: {}]
  %s5 = sld [smem:[#allocation0]]
  $region26: #{timestamp_forward.1} parent=0
    _
  %s7 = ssub.s32 1, %s5
  %s8 = scalar_select 0, %s7, %s5
  // Predicated region
  $region2: #{timestamp_forward.1} parent=0 // pred_check
    _
  $region3: #{timestamp_forward.1} parent=0 // pred_check_branch
    %10 = sbr.rel (0) target = $region5
  $region4: #{timestamp_forward.1} parent=0 // pred_region
    _
  $region5: #{timestamp_forward.1} parent=0 // pred_fallthru
    _
  // Predicated region
  $region6: #{timestamp_forward.1} parent=0 // pred_check
    _
  $region7: #{timestamp_forward.1} parent=0 // pred_check_branch
    %12 = sbr.rel (0) target = $region9
  $region8: #{timestamp_forward.1} parent=0 // pred_region
    _
  $region9: #{timestamp_forward.1} parent=0 // pred_fallthru
    _
  // Predicated region
  $region10: #{timestamp_forward.1} parent=0 // pred_check
    _
  $region11: #{timestamp_forward.1} parent=0 // pred_check_branch
    %14 = sbr.rel (0) target = $region13
  $region12: #{timestamp_forward.1} parent=0 // pred_region
    _
  $region13: #{timestamp_forward.1} parent=0 // pred_fallthru
    _
  // Predicated region
  $region14: #{timestamp_forward.1} parent=0 // pred_check
    _
  $region15: #{timestamp_forward.1} parent=0 // pred_check_branch
    %16 = sbr.rel (0) target = $region17
  $region16: #{timestamp_forward.1} parent=0 // pred_region
    _
  $region17: #{timestamp_forward.1} parent=0 // pred_fallthru
    _
  %v17 = vld [vmem:[%s0] sm:$0xff]
  %v18 = vld [vmem:[%s0 + $0x8] sm:$0xff]
  %v19 = vld [vmem:[%s0 + $0x10] sm:$0xff]
  %v20 = vlaneseq
  %v21 = vand.u32 %v20, 127
  %22 = vset.pattern.permute.xlu0 0
  %23 = vperm.xlu0 %22, %v17
  %v24 = vpop.permute.xlu0 %23
  %25 = vset.pattern.permute.xlu0 0
  %26 = vperm.xlu0 %25, %v18
  %v27 = vpop.permute.xlu0 %26
  %28 = vset.pattern.permute.xlu0 0
  %29 = vperm.xlu0 %28, %v19
  %v30 = vpop.permute.xlu0 %29
  %vm31 = vcmp.eq.s32.totalorder %v21, %v24
  %vm32 = vcmp.eq.s32.totalorder %v21, %v27
  %vm33 = vcmp.eq.s32.totalorder %v21, %v30
  %34 = vset.pattern.permute.xlu0 1
  %35 = vperm.xlu0 %34, %v17
  %v36 = vpop.permute.xlu0 %35
  %37 = vset.pattern.permute.xlu0 1
  %38 = vperm.xlu0 %37, %v18
  %v39 = vpop.permute.xlu0 %38
  %40 = vset.pattern.permute.xlu0 1
  %41 = vperm.xlu0 %40, %v19
  %v42 = vpop.permute.xlu0 %41
  %vm43 = vcmp.eq.s32.totalorder %v21, %v36
  %vm44 = vcmp.eq.s32.totalorder %v21, %v39
  %vm45 = vcmp.eq.s32.totalorder %v21, %v42
  %vm46 = vmor %vm31, %vm43
  %vm47 = vmor %vm32, %vm44
  %vm48 = vmor %vm33, %vm45
  %v49 = vsel %vm46, 1, 0
  %v50 = vsel %vm47, 1, 0
  %v51 = vsel %vm48, 1, 0
  %v52 = vcvt.s32.f32 %v49
  %v53 = vcvt.s32.f32 %v50
  %v54 = vcvt.s32.f32 %v51
  %v55 = vld [vmem:[%s1] sm:$0xff]
  %v56 = vld [vmem:[%s1 + $0x8] sm:$0xff]
  %v57 = vld [vmem:[%s1 + $0x10] sm:$0xff]
  %v58 = vld [vmem:[%s1 + $0x18] sm:$0xff]
  %v59 = vld [vmem:[%s1 + $0x20] sm:$0xff]
  %v60 = vld [vmem:[%s1 + $0x28] sm:$0xff]
  %v61 = vld [vmem:[%s1 + $0x30] sm:$0xff]
  %v62 = vld [vmem:[%s1 + $0x38] sm:$0xf]
  %vm63 = vcmask 490496
  %v65 = vsel %vm63, %v52, 0
  %v68 = vsel %vm63, %v53, 0
  %v71 = vsel %vm63, %v54, 0
  %vm73 = vcmask 1043456
  %v75 = vsel %vm73, %v62, 0
  %77 = vmatprep.subr.mxu0 0.0
  %78 = vmatpush1.msra.mxu0 0.0
  %79 = vmatprep.subr.mxu0 0.0
  %80 = vmatpush1.msra.mxu0 0.0
  %81 = vmatprep.subr.mxu0 0.0
  %82 = vmatpush1.msra.mxu0 0.0
  %83 = vmatprep.subr.mxu0 0.0
  %84 = vmatpush1.msra.mxu0 0.0
  %85 = vmatprep.subr.mxu0 0.0
  %86 = vmatpush1.msra.mxu0 0.0
  %87 = vmatprep.subr.mxu0 0.0
  %88 = vmatpush1.msra.mxu0 0.0
  %89 = vmatprep.subr.mxu0 0.0
  %90 = vmatpush1.msra.mxu0 0.0
  %91 = vmatprep.subr.mxu0 0.0
  %92 = vmatpush1.msra.mxu0 0.0
  %93 = vmatprep.subr.mxu0 0.0
  %94 = vmatpush1.msra.mxu0 %v75
  %95 = vmatprep.subr.mxu0 0.0
  %96 = vmatpush1.msra.mxu0 %v61
  %97 = vmatprep.subr.mxu0 0.0
  %98 = vmatpush1.msra.mxu0 %v60
  %99 = vmatprep.subr.mxu0 0.0
  %100 = vmatpush1.msra.mxu0 %v59
  %101 = vmatprep.subr.mxu0 0.0
  %102 = vmatpush1.msra.mxu0 %v58
  %103 = vmatprep.subr.mxu0 0.0
  %104 = vmatpush1.msra.mxu0 %v57
  %105 = vmatprep.subr.mxu0 0.0
  %106 = vmatpush1.msra.mxu0 %v56
  %107 = vmatprep.subr.mxu0 0.0
  %108 = vmatpush1.msra.mxu0 %v55
  %109 = vmatprep.subr.mxu0 0.0
  %110 = vmatpush2.msra.mxu0 0.0
  %111 = vmatprep.subr.mxu0 0.0
  %112 = vmatpush2.msra.mxu0 0.0
  %113 = vmatprep.subr.mxu0 0.0
  %114 = vmatpush2.msra.mxu0 0.0
  %115 = vmatprep.subr.mxu0 0.0
  %116 = vmatpush2.msra.mxu0 0.0
  %117 = vmatprep.subr.mxu0 0.0
  %118 = vmatpush2.msra.mxu0 0.0
  %119 = vmatprep.subr.mxu0 0.0
  %120 = vmatpush2.msra.mxu0 0.0
  %121 = vmatprep.subr.mxu0 0.0
  %122 = vmatpush2.msra.mxu0 0.0
  %123 = vmatprep.subr.mxu0 0.0
  %124 = vmatpush2.msra.mxu0 0.0
  %125 = vmatprep.subr.mxu0 0.0
  %126 = vmatpush2.msra.mxu0 0.0
  %127 = vmatprep.subr.mxu0 0.0
  %128 = vmatpush2.msra.mxu0 0.0
  %129 = vmatprep.subr.mxu0 0.0
  %130 = vmatpush2.msra.mxu0 0.0
  %131 = vmatprep.subr.mxu0 0.0
  %132 = vmatpush2.msra.mxu0 0.0
  %133 = vmatprep.subr.mxu0 0.0
  %134 = vmatpush2.msra.mxu0 0.0
  %135 = vmatprep.subr.mxu0 0.0
  %136 = vmatpush2.msra.mxu0 0.0
  %137 = vmatprep.subr.mxu0 0.0
  %138 = vmatpush2.msra.mxu0 0.0
  %139 = vmatprep.subr.mxu0 0.0
  %140 = vmatpush2.msra.mxu0 0.0
  %141 = vmatprep.mubr.f32.mxu0 0.0
  %142 = vmatmul.mubr.f32.gmra.mxu0 %v65
  %v143 = vpop.f32.mrf.mxu0
  %v144 = vadd.f32 0.0, %v143
  %v145 = vpop.f32.mrf.mxu0
  %146 = vmatprep.mubr.f32.mxu0 0.0
  %147 = vmatmul.mubr.f32.gmra.mxu0 %v68
  %v148 = vpop.f32.mrf.mxu0
  %v149 = vadd.f32 0.0, %v148
  %v150 = vpop.f32.mrf.mxu0
  %151 = vmatprep.mubr.f32.mxu0 0.0
  %152 = vmatmul.mubr.f32.gmra.mxu0 %v71
  %v153 = vpop.f32.mrf.mxu0
  %v154 = vadd.f32 0.0, %v153
  %v155 = vpop.f32.mrf.mxu0
  %156 = vdwg.mxu0
  %vm157 = vcmask 130048
  %v158 = vsel %vm157, %v144, 0.0
  %159 = vadd.xlane.f32.xlu0 %v158
  %v160 = vpop.xlane.xlu0 %159
  %v161 = vsel %vm157, %v149, 0.0
  %162 = vadd.xlane.f32.xlu0 %v161
  %v163 = vpop.xlane.xlu0 %162
  %v164 = vsel %vm157, %v154, 0.0
  %165 = vadd.xlane.f32.xlu0 %v164
  %v166 = vpop.xlane.xlu0 %165
  %v167 = vrcp.pop 16.0
  %v168 = vmul.f32 %v160, %v167
  %v169 = vmul.f32 %v163, %v167
  %v170 = vmul.f32 %v166, %v167
  %v171 = vsub.f32 %v144, %v168
  %v172 = vsub.f32 %v149, %v169
  %v173 = vsub.f32 %v154, %v170
  %v174 = vmul.f32 %v171, %v171
  %v175 = vmul.f32 %v172, %v172
  %v176 = vmul.f32 %v173, %v173
  %v177 = vsel %vm157, %v174, 0.0
  %178 = vadd.xlane.f32.xlu0 %v177
  %v179 = vpop.xlane.xlu0 %178
  %v180 = vsel %vm157, %v175, 0.0
  %181 = vadd.xlane.f32.xlu0 %v180
  %v182 = vpop.xlane.xlu0 %181
  %v183 = vsel %vm157, %v176, 0.0
  %184 = vadd.xlane.f32.xlu0 %v183
  %v185 = vpop.xlane.xlu0 %184
  %v186 = vmul.f32 %v179, %v167
  %v187 = vmul.f32 %v182, %v167
  %v188 = vmul.f32 %v185, %v167
  %v189 = vadd.f32 %v186, 1e-06
  %v190 = vadd.f32 %v187, 1e-06
  %v191 = vadd.f32 %v188, 1e-06
  %v192 = vrsqrt.pop %v189
  %v193 = vrsqrt.pop %v190
  %v194 = vrsqrt.pop %v191
  %v195 = vmul.f32 %v171, %v192
  %v196 = vmul.f32 %v172, %v193
  %v197 = vmul.f32 %v173, %v194
  %v198 = vld [vmem:[%s2] sm:$0x1]
  %v200 = vlaneseq
  %v201 = vshrl.u32 %v200, 7
  %v202 = vsub.s32 0, %v201
  %v203 = vrot.slane %v198, %v202
  %v205 = vmul.f32 %v195, %v203
  %v206 = vmul.f32 %v196, %v203
  %v207 = vmul.f32 %v197, %v203
  %v208 = vld [vmem:[%s3] sm:$0x1]
  %v210 = vlaneseq
  %v211 = vshrl.u32 %v210, 7
  %v212 = vsub.s32 0, %v211
  %v213 = vrot.slane %v208, %v212
  %v215 = vadd.f32 %v205, %v213
  %v216 = vadd.f32 %v206, %v213
  %v217 = vadd.f32 %v207, %v213
  %218 = vst.msk [vmem:[%s4] sm:$0xff] %vm157, %v215
  %219 = vst.msk [vmem:[%s4 + $0x8] sm:$0xff] %vm157, %v216
  %220 = vst.msk [vmem:[%s4 + $0x10] sm:$0xff] %vm157, %v217
  // Predicated region
  $region18: #{timestamp_forward.1} parent=0 // pred_check
    _
  $region19: #{timestamp_forward.1} parent=0 // pred_check_branch
    %222 = sbr.rel (0) target = $region21
  $region20: #{timestamp_forward.1} parent=0 // pred_region
    _
  $region21: #{timestamp_forward.1} parent=0 // pred_fallthru
    _
  // Predicated region
  $region22: #{timestamp_forward.1} parent=0 // pred_check
    _
  $region23: #{timestamp_forward.1} parent=0 // pred_check_branch
    %224 = sbr.rel (0) target = $region25
  $region24: #{timestamp_forward.1} parent=0 // pred_region
    _
  $region25: #{timestamp_forward.1} parent=0 // pred_fallthru
    _

</llo_original>
